<compile_context>
chip_gen: v6e
topology: v6e:2x2x1
jax: 0.10.0
libtpu: 0.0.40
codegen_flags: <defaults>
</compile_context>

<pallas_src>
import functools

import jax
import jax.numpy as jnp
from jax.experimental import pallas as pl
from jax.experimental.pallas import tpu as pltpu


def _conv1x1_bn_relu_kernel(x_ref, w_ref, b_ref, o_ref, *, c_in, c_out):
    # x_ref: VMEM (c_in, tm)     flattened spatial on the lane axis (lane-dense)
    # w_ref: SMEM (c_out, c_in)  1x1 conv weight with BN scale folded in
    # b_ref: SMEM (c_out,)       folded BN shift
    # o_ref: VMEM (c_out, tm)
    for co in range(c_out):
        acc = x_ref[0:1, :] * w_ref[co, 0] + b_ref[co]
        for ci in range(1, c_in):
            acc = acc + x_ref[ci:ci + 1, :] * w_ref[co, ci]
        o_ref[co:co + 1, :] = jnp.maximum(acc, 0.0).astype(o_ref.dtype)


def _pick_tile_m(m, c_in, c_out):
    """Largest lane-dense spatial tile that divides m and fits a small VMEM budget."""
    if m % 128 != 0:
        return m  # block must equal the full dim when it is not a 128-multiple
    rows = max(c_in, 8) + max(c_out, 8)      # padded sublanes, input + output tiles
    budget = 4 * 1024 * 1024                 # bytes per grid step (before double-buffering)
    for t in (8192, 4096, 2048, 1024, 512, 256, 128):
        if m % t == 0 and rows * t * 4 <= budget:
            return t
    return 128


def _conv_bn_relu_pallas(x_flat, w_folded, shift):
    # x_flat: (N, c_in, M) — NCHW with spatial flattened; M = H_out * W_out
    n, c_in, m = x_flat.shape
    c_out = w_folded.shape[0]
    tm = _pick_tile_m(m, c_in, c_out)
    grid = (n, m // tm)
    kernel = functools.partial(_conv1x1_bn_relu_kernel, c_in=c_in, c_out=c_out)
    return pl.pallas_call(
        kernel,
        out_shape=jax.ShapeDtypeStruct((n, c_out, m), x_flat.dtype),
        grid=grid,
        in_specs=[
            pl.BlockSpec((None, c_in, tm), lambda i, j: (i, 0, j)),
            pl.BlockSpec(memory_space=pltpu.MemorySpace.SMEM),
            pl.BlockSpec(memory_space=pltpu.MemorySpace.SMEM),
        ],
        out_specs=pl.BlockSpec((None, c_out, tm), lambda i, j: (i, 0, j)),
        compiler_params=pltpu.CompilerParams(
            dimension_semantics=("parallel", "parallel"),
            vmem_limit_bytes=32 * 1024 * 1024,
        ),
    )(x_flat, w_folded, shift)


class IdentityOrConvPallas:
    """JAX/Pallas port of FBNet's _IdentityOrConv."""

    def __init__(self, c_in: int, c_out: int, stride: int, key):
        assert stride in (1, 2, 4)
        self.c_in = c_in
        self.c_out = c_out
        self.stride = stride
        self.has_conv = (c_in != c_out) or (stride != 1)
        if self.has_conv:
            # Conv2d(c_in, c_out, k=1, stride, pad=0, bias=False),
            # kaiming_normal_(mode='fan_out', nonlinearity='relu'):
            #   std = sqrt(2 / fan_out), fan_out = c_out * 1 * 1
            std = (2.0 / c_out) ** 0.5
            w = jax.random.normal(key, (c_out, c_in), dtype=jnp.float32) * std

            # Fresh BatchNorm2d, eval-mode fold of the initial running stats.
            # TODO(synk): training-mode BN (batch statistics + running-stat
            # updates) is not implemented.
            gamma = jnp.ones((c_out,), jnp.float32)
            beta = jnp.zeros((c_out,), jnp.float32)
            running_mean = jnp.zeros((c_out,), jnp.float32)
            running_var = jnp.ones((c_out,), jnp.float32)
            eps = 1e-5
            scale = gamma / jnp.sqrt(running_var + eps)
            self.w_folded = w * scale[:, None]          # (c_out, c_in), BN scale folded
            self.shift = beta - running_mean * scale    # (c_out,)

    def __call__(self, x):
        # x: NCHW float32
        if not self.has_conv:
            return x
        n, c, h, w = x.shape
        assert c == self.c_in
        s = self.stride
        # 1x1 conv with stride s == channel mix on the strided spatial grid.
        # (Only the stride>1 path pays this one XLA subsample pass.)
        x_sub = x if s == 1 else x[:, :, ::s, ::s]
        h_out, w_out = x_sub.shape[2], x_sub.shape[3]
        x_flat = x_sub.reshape(n, self.c_in, h_out * w_out)  # free view (contiguous NCHW)
        y_flat = _conv_bn_relu_pallas(x_flat, self.w_folded, self.shift)
        return y_flat.reshape(n, self.c_out, h_out, w_out)   # free view back to NCHW


def _reference(x_sub, w_folded, shift):
    y = jnp.einsum("nchw,oc->nohw", x_sub, w_folded)
    y = y + shift[None, :, None, None]
    return jnp.maximum(y, 0.0)


if __name__ == "__main__":
    key = jax.random.PRNGKey(0)
    k_x, k_w, k_x3, k_w3 = jax.random.split(key, 4)

    # Conv path: c_in != c_out, stride 2.
    x = jax.random.normal(k_x, (2, 4, 16, 16), dtype=jnp.float32)  # NCHW
    mod = IdentityOrConvPallas(c_in=4, c_out=8, stride=2, key=k_w)
    out = jax.block_until_ready(mod(x))
    assert out.shape == (2, 8, 8, 8)
    ref = _reference(x[:, :, ::2, ::2], mod.w_folded, mod.shift)
    assert jnp.allclose(out, ref, atol=1e-5, rtol=1e-5)

    # Conv path: c_in != c_out, stride 1 (fully fused, no subsample pass).
    mod_s1 = IdentityOrConvPallas(c_in=4, c_out=8, stride=1, key=k_w)
    out_s1 = jax.block_until_ready(mod_s1(x))
    assert out_s1.shape == (2, 8, 16, 16)
    ref_s1 = _reference(x, mod_s1.w_folded, mod_s1.shift)
    assert jnp.allclose(out_s1, ref_s1, atol=1e-5, rtol=1e-5)

    # Conv path exercising a multi-tile grid over the flattened spatial axis.
    x3 = jax.random.normal(k_x3, (1, 3, 32, 48), dtype=jnp.float32)
    mod3 = IdentityOrConvPallas(c_in=3, c_out=16, stride=2, key=k_w3)
    out3 = jax.block_until_ready(mod3(x3))
    assert out3.shape == (1, 16, 16, 24)
    ref3 = _reference(x3[:, :, ::2, ::2], mod3.w_folded, mod3.shift)
    assert jnp.allclose(out3, ref3, atol=1e-5, rtol=1e-5)

    # Identity path: c_in == c_out and stride == 1.
    mod_id = IdentityOrConvPallas(c_in=4, c_out=4, stride=1, key=k_w)
    out_id = jax.block_until_ready(mod_id(x))
    assert jnp.array_equal(out_id, x)

    print("KERNEL_OK")
</pallas_src>

<mosaic_0001>
module attributes {stable_mosaic.version = 11 : i64} {
  func.func @_conv1x1_bn_relu_kernel(%arg0: i32, %arg1: i32, %arg2: memref<1x4x64xf32, #tpu.memory_space<vmem>>, %arg3: memref<8x4xf32, #tpu.memory_space<smem>>, %arg4: memref<8xf32, #tpu.memory_space<smem>>, %arg5: memref<1x8x64xf32, #tpu.memory_space<vmem>>) attributes {dimension_semantics = [#tpu.dimension_semantics<parallel>, #tpu.dimension_semantics<parallel>], iteration_bounds = array<i64: 2, 1>, scalar_prefetch = 0 : i64, scratch_operands = 0 : i64, tpu.core_type = #tpu.core_type<tc>, window_params = [{transform_indices = @transform_0, window_bounds = array<i64: 1, 4, 64>}, {transform_indices = @transform_1, window_bounds = array<i64: 8, 4>}, {transform_indices = @transform_2, window_bounds = array<i64: 8>}, {transform_indices = @transform_3, window_bounds = array<i64: 1, 8, 64>}]} {
    %c0 = arith.constant 0 : index
    %c0_0 = arith.constant 0 : index
    %c0_1 = arith.constant 0 : index
    %0 = vector.load %arg2[%c0, %c0_0, %c0_1] : memref<1x4x64xf32, #tpu.memory_space<vmem>>, vector<1x1x64xf32>
    %1 = vector.shape_cast %0 : vector<1x1x64xf32> to vector<1x64xf32>
    %c0_2 = arith.constant 0 : index
    %c0_3 = arith.constant 0 : index
    %2 = memref.load %arg3[%c0_2, %c0_3] : memref<8x4xf32, #tpu.memory_space<smem>>
    %3 = vector.broadcast %2 : f32 to vector<1x64xf32>
    %4 = arith.mulf %1, %3 : vector<1x64xf32>
    %c0_4 = arith.constant 0 : index
    %5 = memref.load %arg4[%c0_4] : memref<8xf32, #tpu.memory_space<smem>>
    %6 = vector.broadcast %5 : f32 to vector<1x64xf32>
    %7 = arith.addf %4, %6 : vector<1x64xf32>
    %c0_5 = arith.constant 0 : index
    %c1 = arith.constant 1 : index
    %c0_6 = arith.constant 0 : index
    %8 = vector.load %arg2[%c0_5, %c1, %c0_6] : memref<1x4x64xf32, #tpu.memory_space<vmem>>, vector<1x1x64xf32>
    %9 = vector.shape_cast %8 : vector<1x1x64xf32> to vector<1x64xf32>
    %c0_7 = arith.constant 0 : index
    %c1_8 = arith.constant 1 : index
    %10 = memref.load %arg3[%c0_7, %c1_8] : memref<8x4xf32, #tpu.memory_space<smem>>
    %11 = vector.broadcast %10 : f32 to vector<1x64xf32>
    %12 = arith.mulf %9, %11 : vector<1x64xf32>
    %13 = arith.addf %7, %12 : vector<1x64xf32>
    %c0_9 = arith.constant 0 : index
    %c2 = arith.constant 2 : index
    %c0_10 = arith.constant 0 : index
    %14 = vector.load %arg2[%c0_9, %c2, %c0_10] : memref<1x4x64xf32, #tpu.memory_space<vmem>>, vector<1x1x64xf32>
    %15 = vector.shape_cast %14 : vector<1x1x64xf32> to vector<1x64xf32>
    %c0_11 = arith.constant 0 : index
    %c2_12 = arith.constant 2 : index
    %16 = memref.load %arg3[%c0_11, %c2_12] : memref<8x4xf32, #tpu.memory_space<smem>>
    %17 = vector.broadcast %16 : f32 to vector<1x64xf32>
    %18 = arith.mulf %15, %17 : vector<1x64xf32>
    %19 = arith.addf %13, %18 : vector<1x64xf32>
    %c0_13 = arith.constant 0 : index
    %c3 = arith.constant 3 : index
    %c0_14 = arith.constant 0 : index
    %20 = vector.load %arg2[%c0_13, %c3, %c0_14] : memref<1x4x64xf32, #tpu.memory_space<vmem>>, vector<1x1x64xf32>
    %21 = vector.shape_cast %20 : vector<1x1x64xf32> to vector<1x64xf32>
    %c0_15 = arith.constant 0 : index
    %c3_16 = arith.constant 3 : index
    %22 = memref.load %arg3[%c0_15, %c3_16] : memref<8x4xf32, #tpu.memory_space<smem>>
    %23 = vector.broadcast %22 : f32 to vector<1x64xf32>
    %24 = arith.mulf %21, %23 : vector<1x64xf32>
    %25 = arith.addf %19, %24 : vector<1x64xf32>
    %cst = arith.constant 0.000000e+00 : f32
    %26 = vector.broadcast %cst : f32 to vector<1x64xf32>
    %27 = arith.maximumf %25, %26 : vector<1x64xf32>
    %c0_17 = arith.constant 0 : index
    %c0_18 = arith.constant 0 : index
    %c0_19 = arith.constant 0 : index
    %28 = vector.load %arg5[%c0_17, %c0_18, %c0_19] : memref<1x8x64xf32, #tpu.memory_space<vmem>>, vector<1x1x64xf32>
    %29 = vector.shape_cast %28 : vector<1x1x64xf32> to vector<1x64xf32>
    %30 = vector.shape_cast %27 : vector<1x64xf32> to vector<1x1x64xf32>
    tpu.vector_store %arg5[%c0_17, %c0_18, %c0_19], %30 {strides = array<i32>} : memref<1x8x64xf32, #tpu.memory_space<vmem>>, vector<1x1x64xf32>,
    %c0_20 = arith.constant 0 : index
    %c0_21 = arith.constant 0 : index
    %c0_22 = arith.constant 0 : index
    %31 = vector.load %arg2[%c0_20, %c0_21, %c0_22] : memref<1x4x64xf32, #tpu.memory_space<vmem>>, vector<1x1x64xf32>
    %32 = vector.shape_cast %31 : vector<1x1x64xf32> to vector<1x64xf32>
    %c1_23 = arith.constant 1 : index
    %c0_24 = arith.constant 0 : index
    %33 = memref.load %arg3[%c1_23, %c0_24] : memref<8x4xf32, #tpu.memory_space<smem>>
    %34 = vector.broadcast %33 : f32 to vector<1x64xf32>
    %35 = arith.mulf %32, %34 : vector<1x64xf32>
    %c1_25 = arith.constant 1 : index
    %36 = memref.load %arg4[%c1_25] : memref<8xf32, #tpu.memory_space<smem>>
    %37 = vector.broadcast %36 : f32 to vector<1x64xf32>
    %38 = arith.addf %35, %37 : vector<1x64xf32>
    %c0_26 = arith.constant 0 : index
    %c1_27 = arith.constant 1 : index
    %c0_28 = arith.constant 0 : index
    %39 = vector.load %arg2[%c0_26, %c1_27, %c0_28] : memref<1x4x64xf32, #tpu.memory_space<vmem>>, vector<1x1x64xf32>
    %40 = vector.shape_cast %39 : vector<1x1x64xf32> to vector<1x64xf32>
    %c1_29 = arith.constant 1 : index
    %c1_30 = arith.constant 1 : index
    %41 = memref.load %arg3[%c1_29, %c1_30] : memref<8x4xf32, #tpu.memory_space<smem>>
    %42 = vector.broadcast %41 : f32 to vector<1x64xf32>
    %43 = arith.mulf %40, %42 : vector<1x64xf32>
    %44 = arith.addf %38, %43 : vector<1x64xf32>
    %c0_31 = arith.constant 0 : index
    %c2_32 = arith.constant 2 : index
    %c0_33 = arith.constant 0 : index
    %45 = vector.load %arg2[%c0_31, %c2_32, %c0_33] : memref<1x4x64xf32, #tpu.memory_space<vmem>>, vector<1x1x64xf32>
    %46 = vector.shape_cast %45 : vector<1x1x64xf32> to vector<1x64xf32>
    %c1_34 = arith.constant 1 : index
    %c2_35 = arith.constant 2 : index
    %47 = memref.load %arg3[%c1_34, %c2_35] : memref<8x4xf32, #tpu.memory_space<smem>>
    %48 = vector.broadcast %47 : f32 to vector<1x64xf32>
    %49 = arith.mulf %46, %48 : vector<1x64xf32>
    %50 = arith.addf %44, %49 : vector<1x64xf32>
    %c0_36 = arith.constant 0 : index
    %c3_37 = arith.constant 3 : index
    %c0_38 = arith.constant 0 : index
    %51 = vector.load %arg2[%c0_36, %c3_37, %c0_38] : memref<1x4x64xf32, #tpu.memory_space<vmem>>, vector<1x1x64xf32>
    %52 = vector.shape_cast %51 : vector<1x1x64xf32> to vector<1x64xf32>
    %c1_39 = arith.constant 1 : index
    %c3_40 = arith.constant 3 : index
    %53 = memref.load %arg3[%c1_39, %c3_40] : memref<8x4xf32, #tpu.memory_space<smem>>
    %54 = vector.broadcast %53 : f32 to vector<1x64xf32>
    %55 = arith.mulf %52, %54 : vector<1x64xf32>
    %56 = arith.addf %50, %55 : vector<1x64xf32>
    %cst_41 = arith.constant 0.000000e+00 : f32
    %57 = vector.broadcast %cst_41 : f32 to vector<1x64xf32>
    %58 = arith.maximumf %56, %57 : vector<1x64xf32>
    %c0_42 = arith.constant 0 : index
    %c1_43 = arith.constant 1 : index
    %c0_44 = arith.constant 0 : index
    %59 = vector.load %arg5[%c0_42, %c1_43, %c0_44] : memref<1x8x64xf32, #tpu.memory_space<vmem>>, vector<1x1x64xf32>
    %60 = vector.shape_cast %59 : vector<1x1x64xf32> to vector<1x64xf32>
    %61 = vector.shape_cast %58 : vector<1x64xf32> to vector<1x1x64xf32>
    tpu.vector_store %arg5[%c0_42, %c1_43, %c0_44], %61 {strides = array<i32>} : memref<1x8x64xf32, #tpu.memory_space<vmem>>, vector<1x1x64xf32>,
    %c0_45 = arith.constant 0 : index
    %c0_46 = arith.constant 0 : index
    %c0_47 = arith.constant 0 : index
    %62 = vector.load %arg2[%c0_45, %c0_46, %c0_47] : memref<1x4x64xf32, #tpu.memory_space<vmem>>, vector<1x1x64xf32>
    %63 = vector.shape_cast %62 : vector<1x1x64xf32> to vector<1x64xf32>
    %c2_48 = arith.constant 2 : index
    %c0_49 = arith.constant 0 : index
    %64 = memref.load %arg3[%c2_48, %c0_49] : memref<8x4xf32, #tpu.memory_space<smem>>
    %65 = vector.broadcast %64 : f32 to vector<1x64xf32>
    %66 = arith.mulf %63, %65 : vector<1x64xf32>
    %c2_50 = arith.constant 2 : index
    %67 = memref.load %arg4[%c2_50] : memref<8xf32, #tpu.memory_space<smem>>
    %68 = vector.broadcast %67 : f32 to vector<1x64xf32>
    %69 = arith.addf %66, %68 : vector<1x64xf32>
    %c0_51 = arith.constant 0 : index
    %c1_52 = arith.constant 1 : index
    %c0_53 = arith.constant 0 : index
    %70 = vector.load %arg2[%c0_51, %c1_52, %c0_53] : memref<1x4x64xf32, #tpu.memory_space<vmem>>, vector<1x1x64xf32>
    %71 = vector.shape_cast %70 : vector<1x1x64xf32> to vector<1x64xf32>
    %c2_54 = arith.constant 2 : index
    %c1_55 = arith.constant 1 : index
    %72 = memref.load %arg3[%c2_54, %c1_55] : memref<8x4xf32, #tpu.memory_space<smem>>
    %73 = vector.broadcast %72 : f32 to vector<1x64xf32>
    %74 = arith.mulf %71, %73 : vector<1x64xf32>
    %75 = arith.addf %69, %74 : vector<1x64xf32>
    %c0_56 = arith.constant 0 : index
    %c2_57 = arith.constant 2 : index
    %c0_58 = arith.constant 0 : index
    %76 = vector.load %arg2[%c0_56, %c2_57, %c0_58] : memref<1x4x64xf32, #tpu.memory_space<vmem>>, vector<1x1x64xf32>
    %77 = vector.shape_cast %76 : vector<1x1x64xf32> to vector<1x64xf32>
    %c2_59 = arith.constant 2 : index
    %c2_60 = arith.constant 2 : index
    %78 = memref.load %arg3[%c2_59, %c2_60] : memref<8x4xf32, #tpu.memory_space<smem>>
    %79 = vector.broadcast %78 : f32 to vector<1x64xf32>
    %80 = arith.mulf %77, %79 : vector<1x64xf32>
    %81 = arith.addf %75, %80 : vector<1x64xf32>
    %c0_61 = arith.constant 0 : index
    %c3_62 = arith.constant 3 : index
    %c0_63 = arith.constant 0 : index
    %82 = vector.load %arg2[%c0_61, %c3_62, %c0_63] : memref<1x4x64xf32, #tpu.memory_space<vmem>>, vector<1x1x64xf32>
    %83 = vector.shape_cast %82 : vector<1x1x64xf32> to vector<1x64xf32>
    %c2_64 = arith.constant 2 : index
    %c3_65 = arith.constant 3 : index
    %84 = memref.load %arg3[%c2_64, %c3_65] : memref<8x4xf32, #tpu.memory_space<smem>>
    %85 = vector.broadcast %84 : f32 to vector<1x64xf32>
    %86 = arith.mulf %83, %85 : vector<1x64xf32>
    %87 = arith.addf %81, %86 : vector<1x64xf32>
    %cst_66 = arith.constant 0.000000e+00 : f32
    %88 = vector.broadcast %cst_66 : f32 to vector<1x64xf32>
    %89 = arith.maximumf %87, %88 : vector<1x64xf32>
    %c0_67 = arith.constant 0 : index
    %c2_68 = arith.constant 2 : index
    %c0_69 = arith.constant 0 : index
    %90 = vector.load %arg5[%c0_67, %c2_68, %c0_69] : memref<1x8x64xf32, #tpu.memory_space<vmem>>, vector<1x1x64xf32>
    %91 = vector.shape_cast %90 : vector<1x1x64xf32> to vector<1x64xf32>
    %92 = vector.shape_cast %89 : vector<1x64xf32> to vector<1x1x64xf32>
    tpu.vector_store %arg5[%c0_67, %c2_68, %c0_69], %92 {strides = array<i32>} : memref<1x8x64xf32, #tpu.memory_space<vmem>>, vector<1x1x64xf32>,
    %c0_70 = arith.constant 0 : index
    %c0_71 = arith.constant 0 : index
    %c0_72 = arith.constant 0 : index
    %93 = vector.load %arg2[%c0_70, %c0_71, %c0_72] : memref<1x4x64xf32, #tpu.memory_space<vmem>>, vector<1x1x64xf32>
    %94 = vector.shape_cast %93 : vector<1x1x64xf32> to vector<1x64xf32>
    %c3_73 = arith.constant 3 : index
    %c0_74 = arith.constant 0 : index
    %95 = memref.load %arg3[%c3_73, %c0_74] : memref<8x4xf32, #tpu.memory_space<smem>>
    %96 = vector.broadcast %95 : f32 to vector<1x64xf32>
    %97 = arith.mulf %94, %96 : vector<1x64xf32>
    %c3_75 = arith.constant 3 : index
    %98 = memref.load %arg4[%c3_75] : memref<8xf32, #tpu.memory_space<smem>>
    %99 = vector.broadcast %98 : f32 to vector<1x64xf32>
    %100 = arith.addf %97, %99 : vector<1x64xf32>
    %c0_76 = arith.constant 0 : index
    %c1_77 = arith.constant 1 : index
    %c0_78 = arith.constant 0 : index
    %101 = vector.load %arg2[%c0_76, %c1_77, %c0_78] : memref<1x4x64xf32, #tpu.memory_space<vmem>>, vector<1x1x64xf32>
    %102 = vector.shape_cast %101 : vector<1x1x64xf32> to vector<1x64xf32>
    %c3_79 = arith.constant 3 : index
    %c1_80 = arith.constant 1 : index
    %103 = memref.load %arg3[%c3_79, %c1_80] : memref<8x4xf32, #tpu.memory_space<smem>>
    %104 = vector.broadcast %103 : f32 to vector<1x64xf32>
    %105 = arith.mulf %102, %104 : vector<1x64xf32>
    %106 = arith.addf %100, %105 : vector<1x64xf32>
    %c0_81 = arith.constant 0 : index
    %c2_82 = arith.constant 2 : index
    %c0_83 = arith.constant 0 : index
    %107 = vector.load %arg2[%c0_81, %c2_82, %c0_83] : memref<1x4x64xf32, #tpu.memory_space<vmem>>, vector<1x1x64xf32>
    %108 = vector.shape_cast %107 : vector<1x1x64xf32> to vector<1x64xf32>
    %c3_84 = arith.constant 3 : index
    %c2_85 = arith.constant 2 : index
    %109 = memref.load %arg3[%c3_84, %c2_85] : memref<8x4xf32, #tpu.memory_space<smem>>
    %110 = vector.broadcast %109 : f32 to vector<1x64xf32>
    %111 = arith.mulf %108, %110 : vector<1x64xf32>
    %112 = arith.addf %106, %111 : vector<1x64xf32>
    %c0_86 = arith.constant 0 : index
    %c3_87 = arith.constant 3 : index
    %c0_88 = arith.constant 0 : index
    %113 = vector.load %arg2[%c0_86, %c3_87, %c0_88] : memref<1x4x64xf32, #tpu.memory_space<vmem>>, vector<1x1x64xf32>
    %114 = vector.shape_cast %113 : vector<1x1x64xf32> to vector<1x64xf32>
    %c3_89 = arith.constant 3 : index
    %c3_90 = arith.constant 3 : index
    %115 = memref.load %arg3[%c3_89, %c3_90] : memref<8x4xf32, #tpu.memory_space<smem>>
    %116 = vector.broadcast %115 : f32 to vector<1x64xf32>
    %117 = arith.mulf %114, %116 : vector<1x64xf32>
    %118 = arith.addf %112, %117 : vector<1x64xf32>
    %cst_91 = arith.constant 0.000000e+00 : f32
    %119 = vector.broadcast %cst_91 : f32 to vector<1x64xf32>
    %120 = arith.maximumf %118, %119 : vector<1x64xf32>
    %c0_92 = arith.constant 0 : index
    %c3_93 = arith.constant 3 : index
    %c0_94 = arith.constant 0 : index
    %121 = vector.load %arg5[%c0_92, %c3_93, %c0_94] : memref<1x8x64xf32, #tpu.memory_space<vmem>>, vector<1x1x64xf32>
    %122 = vector.shape_cast %121 : vector<1x1x64xf32> to vector<1x64xf32>
    %123 = vector.shape_cast %120 : vector<1x64xf32> to vector<1x1x64xf32>
    tpu.vector_store %arg5[%c0_92, %c3_93, %c0_94], %123 {strides = array<i32>} : memref<1x8x64xf32, #tpu.memory_space<vmem>>, vector<1x1x64xf32>,
    %c0_95 = arith.constant 0 : index
    %c0_96 = arith.constant 0 : index
    %c0_97 = arith.constant 0 : index
    %124 = vector.load %arg2[%c0_95, %c0_96, %c0_97] : memref<1x4x64xf32, #tpu.memory_space<vmem>>, vector<1x1x64xf32>
    %125 = vector.shape_cast %124 : vector<1x1x64xf32> to vector<1x64xf32>
    %c4 = arith.constant 4 : index
    %c0_98 = arith.constant 0 : index
    %126 = memref.load %arg3[%c4, %c0_98] : memref<8x4xf32, #tpu.memory_space<smem>>
    %127 = vector.broadcast %126 : f32 to vector<1x64xf32>
    %128 = arith.mulf %125, %127 : vector<1x64xf32>
    %c4_99 = arith.constant 4 : index
    %129 = memref.load %arg4[%c4_99] : memref<8xf32, #tpu.memory_space<smem>>
    %130 = vector.broadcast %129 : f32 to vector<1x64xf32>
    %131 = arith.addf %128, %130 : vector<1x64xf32>
    %c0_100 = arith.constant 0 : index
    %c1_101 = arith.constant 1 : index
    %c0_102 = arith.constant 0 : index
    %132 = vector.load %arg2[%c0_100, %c1_101, %c0_102] : memref<1x4x64xf32, #tpu.memory_space<vmem>>, vector<1x1x64xf32>
    %133 = vector.shape_cast %132 : vector<1x1x64xf32> to vector<1x64xf32>
    %c4_103 = arith.constant 4 : index
    %c1_104 = arith.constant 1 : index
    %134 = memref.load %arg3[%c4_103, %c1_104] : memref<8x4xf32, #tpu.memory_space<smem>>
    %135 = vector.broadcast %134 : f32 to vector<1x64xf32>
    %136 = arith.mulf %133, %135 : vector<1x64xf32>
    %137 = arith.addf %131, %136 : vector<1x64xf32>
    %c0_105 = arith.constant 0 : index
    %c2_106 = arith.constant 2 : index
    %c0_107 = arith.constant 0 : index
    %138 = vector.load %arg2[%c0_105, %c2_106, %c0_107] : memref<1x4x64xf32, #tpu.memory_space<vmem>>, vector<1x1x64xf32>
    %139 = vector.shape_cast %138 : vector<1x1x64xf32> to vector<1x64xf32>
    %c4_108 = arith.constant 4 : index
    %c2_109 = arith.constant 2 : index
    %140 = memref.load %arg3[%c4_108, %c2_109] : memref<8x4xf32, #tpu.memory_space<smem>>
    %141 = vector.broadcast %140 : f32 to vector<1x64xf32>
    %142 = arith.mulf %139, %141 : vector<1x64xf32>
    %143 = arith.addf %137, %142 : vector<1x64xf32>
    %c0_110 = arith.constant 0 : index
    %c3_111 = arith.constant 3 : index
    %c0_112 = arith.constant 0 : index
    %144 = vector.load %arg2[%c0_110, %c3_111, %c0_112] : memref<1x4x64xf32, #tpu.memory_space<vmem>>, vector<1x1x64xf32>
    %145 = vector.shape_cast %144 : vector<1x1x64xf32> to vector<1x64xf32>
    %c4_113 = arith.constant 4 : index
    %c3_114 = arith.constant 3 : index
    %146 = memref.load %arg3[%c4_113, %c3_114] : memref<8x4xf32, #tpu.memory_space<smem>>
    %147 = vector.broadcast %146 : f32 to vector<1x64xf32>
    %148 = arith.mulf %145, %147 : vector<1x64xf32>
    %149 = arith.addf %143, %148 : vector<1x64xf32>
    %cst_115 = arith.constant 0.000000e+00 : f32
    %150 = vector.broadcast %cst_115 : f32 to vector<1x64xf32>
    %151 = arith.maximumf %149, %150 : vector<1x64xf32>
    %c0_116 = arith.constant 0 : index
    %c4_117 = arith.constant 4 : index
    %c0_118 = arith.constant 0 : index
    %152 = vector.load %arg5[%c0_116, %c4_117, %c0_118] : memref<1x8x64xf32, #tpu.memory_space<vmem>>, vector<1x1x64xf32>
    %153 = vector.shape_cast %152 : vector<1x1x64xf32> to vector<1x64xf32>
    %154 = vector.shape_cast %151 : vector<1x64xf32> to vector<1x1x64xf32>
    tpu.vector_store %arg5[%c0_116, %c4_117, %c0_118], %154 {strides = array<i32>} : memref<1x8x64xf32, #tpu.memory_space<vmem>>, vector<1x1x64xf32>,
    %c0_119 = arith.constant 0 : index
    %c0_120 = arith.constant 0 : index
    %c0_121 = arith.constant 0 : index
    %155 = vector.load %arg2[%c0_119, %c0_120, %c0_121] : memref<1x4x64xf32, #tpu.memory_space<vmem>>, vector<1x1x64xf32>
    %156 = vector.shape_cast %155 : vector<1x1x64xf32> to vector<1x64xf32>
    %c5 = arith.constant 5 : index
    %c0_122 = arith.constant 0 : index
    %157 = memref.load %arg3[%c5, %c0_122] : memref<8x4xf32, #tpu.memory_space<smem>>
    %158 = vector.broadcast %157 : f32 to vector<1x64xf32>
    %159 = arith.mulf %156, %158 : vector<1x64xf32>
    %c5_123 = arith.constant 5 : index
    %160 = memref.load %arg4[%c5_123] : memref<8xf32, #tpu.memory_space<smem>>
    %161 = vector.broadcast %160 : f32 to vector<1x64xf32>
    %162 = arith.addf %159, %161 : vector<1x64xf32>
    %c0_124 = arith.constant 0 : index
    %c1_125 = arith.constant 1 : index
    %c0_126 = arith.constant 0 : index
    %163 = vector.load %arg2[%c0_124, %c1_125, %c0_126] : memref<1x4x64xf32, #tpu.memory_space<vmem>>, vector<1x1x64xf32>
    %164 = vector.shape_cast %163 : vector<1x1x64xf32> to vector<1x64xf32>
    %c5_127 = arith.constant 5 : index
    %c1_128 = arith.constant 1 : index
    %165 = memref.load %arg3[%c5_127, %c1_128] : memref<8x4xf32, #tpu.memory_space<smem>>
    %166 = vector.broadcast %165 : f32 to vector<1x64xf32>
    %167 = arith.mulf %164, %166 : vector<1x64xf32>
    %168 = arith.addf %162, %167 : vector<1x64xf32>
    %c0_129 = arith.constant 0 : index
    %c2_130 = arith.constant 2 : index
    %c0_131 = arith.constant 0 : index
    %169 = vector.load %arg2[%c0_129, %c2_130, %c0_131] : memref<1x4x64xf32, #tpu.memory_space<vmem>>, vector<1x1x64xf32>
    %170 = vector.shape_cast %169 : vector<1x1x64xf32> to vector<1x64xf32>
    %c5_132 = arith.constant 5 : index
    %c2_133 = arith.constant 2 : index
    %171 = memref.load %arg3[%c5_132, %c2_133] : memref<8x4xf32, #tpu.memory_space<smem>>
    %172 = vector.broadcast %171 : f32 to vector<1x64xf32>
    %173 = arith.mulf %170, %172 : vector<1x64xf32>
    %174 = arith.addf %168, %173 : vector<1x64xf32>
    %c0_134 = arith.constant 0 : index
    %c3_135 = arith.constant 3 : index
    %c0_136 = arith.constant 0 : index
    %175 = vector.load %arg2[%c0_134, %c3_135, %c0_136] : memref<1x4x64xf32, #tpu.memory_space<vmem>>, vector<1x1x64xf32>
    %176 = vector.shape_cast %175 : vector<1x1x64xf32> to vector<1x64xf32>
    %c5_137 = arith.constant 5 : index
    %c3_138 = arith.constant 3 : index
    %177 = memref.load %arg3[%c5_137, %c3_138] : memref<8x4xf32, #tpu.memory_space<smem>>
    %178 = vector.broadcast %177 : f32 to vector<1x64xf32>
    %179 = arith.mulf %176, %178 : vector<1x64xf32>
    %180 = arith.addf %174, %179 : vector<1x64xf32>
    %cst_139 = arith.constant 0.000000e+00 : f32
    %181 = vector.broadcast %cst_139 : f32 to vector<1x64xf32>
    %182 = arith.maximumf %180, %181 : vector<1x64xf32>
    %c0_140 = arith.constant 0 : index
    %c5_141 = arith.constant 5 : index
    %c0_142 = arith.constant 0 : index
    %183 = vector.load %arg5[%c0_140, %c5_141, %c0_142] : memref<1x8x64xf32, #tpu.memory_space<vmem>>, vector<1x1x64xf32>
    %184 = vector.shape_cast %183 : vector<1x1x64xf32> to vector<1x64xf32>
    %185 = vector.shape_cast %182 : vector<1x64xf32> to vector<1x1x64xf32>
    tpu.vector_store %arg5[%c0_140, %c5_141, %c0_142], %185 {strides = array<i32>} : memref<1x8x64xf32, #tpu.memory_space<vmem>>, vector<1x1x64xf32>,
    %c0_143 = arith.constant 0 : index
    %c0_144 = arith.constant 0 : index
    %c0_145 = arith.constant 0 : index
    %186 = vector.load %arg2[%c0_143, %c0_144, %c0_145] : memref<1x4x64xf32, #tpu.memory_space<vmem>>, vector<1x1x64xf32>
    %187 = vector.shape_cast %186 : vector<1x1x64xf32> to vector<1x64xf32>
    %c6 = arith.constant 6 : index
    %c0_146 = arith.constant 0 : index
    %188 = memref.load %arg3[%c6, %c0_146] : memref<8x4xf32, #tpu.memory_space<smem>>
    %189 = vector.broadcast %188 : f32 to vector<1x64xf32>
    %190 = arith.mulf %187, %189 : vector<1x64xf32>
    %c6_147 = arith.constant 6 : index
    %191 = memref.load %arg4[%c6_147] : memref<8xf32, #tpu.memory_space<smem>>
    %192 = vector.broadcast %191 : f32 to vector<1x64xf32>
    %193 = arith.addf %190, %192 : vector<1x64xf32>
    %c0_148 = arith.constant 0 : index
    %c1_149 = arith.constant 1 : index
    %c0_150 = arith.constant 0 : index
    %194 = vector.load %arg2[%c0_148, %c1_149, %c0_150] : memref<1x4x64xf32, #tpu.memory_space<vmem>>, vector<1x1x64xf32>
    %195 = vector.shape_cast %194 : vector<1x1x64xf32> to vector<1x64xf32>
    %c6_151 = arith.constant 6 : index
    %c1_152 = arith.constant 1 : index
    %196 = memref.load %arg3[%c6_151, %c1_152] : memref<8x4xf32, #tpu.memory_space<smem>>
    %197 = vector.broadcast %196 : f32 to vector<1x64xf32>
    %198 = arith.mulf %195, %197 : vector<1x64xf32>
    %199 = arith.addf %193, %198 : vector<1x64xf32>
    %c0_153 = arith.constant 0 : index
    %c2_154 = arith.constant 2 : index
    %c0_155 = arith.constant 0 : index
    %200 = vector.load %arg2[%c0_153, %c2_154, %c0_155] : memref<1x4x64xf32, #tpu.memory_space<vmem>>, vector<1x1x64xf32>
    %201 = vector.shape_cast %200 : vector<1x1x64xf32> to vector<1x64xf32>
    %c6_156 = arith.constant 6 : index
    %c2_157 = arith.constant 2 : index
    %202 = memref.load %arg3[%c6_156, %c2_157] : memref<8x4xf32, #tpu.memory_space<smem>>
    %203 = vector.broadcast %202 : f32 to vector<1x64xf32>
    %204 = arith.mulf %201, %203 : vector<1x64xf32>
    %205 = arith.addf %199, %204 : vector<1x64xf32>
    %c0_158 = arith.constant 0 : index
    %c3_159 = arith.constant 3 : index
    %c0_160 = arith.constant 0 : index
    %206 = vector.load %arg2[%c0_158, %c3_159, %c0_160] : memref<1x4x64xf32, #tpu.memory_space<vmem>>, vector<1x1x64xf32>
    %207 = vector.shape_cast %206 : vector<1x1x64xf32> to vector<1x64xf32>
    %c6_161 = arith.constant 6 : index
    %c3_162 = arith.constant 3 : index
    %208 = memref.load %arg3[%c6_161, %c3_162] : memref<8x4xf32, #tpu.memory_space<smem>>
    %209 = vector.broadcast %208 : f32 to vector<1x64xf32>
    %210 = arith.mulf %207, %209 : vector<1x64xf32>
    %211 = arith.addf %205, %210 : vector<1x64xf32>
    %cst_163 = arith.constant 0.000000e+00 : f32
    %212 = vector.broadcast %cst_163 : f32 to vector<1x64xf32>
    %213 = arith.maximumf %211, %212 : vector<1x64xf32>
    %c0_164 = arith.constant 0 : index
    %c6_165 = arith.constant 6 : index
    %c0_166 = arith.constant 0 : index
    %214 = vector.load %arg5[%c0_164, %c6_165, %c0_166] : memref<1x8x64xf32, #tpu.memory_space<vmem>>, vector<1x1x64xf32>
    %215 = vector.shape_cast %214 : vector<1x1x64xf32> to vector<1x64xf32>
    %216 = vector.shape_cast %213 : vector<1x64xf32> to vector<1x1x64xf32>
    tpu.vector_store %arg5[%c0_164, %c6_165, %c0_166], %216 {strides = array<i32>} : memref<1x8x64xf32, #tpu.memory_space<vmem>>, vector<1x1x64xf32>,
    %c0_167 = arith.constant 0 : index
    %c0_168 = arith.constant 0 : index
    %c0_169 = arith.constant 0 : index
    %217 = vector.load %arg2[%c0_167, %c0_168, %c0_169] : memref<1x4x64xf32, #tpu.memory_space<vmem>>, vector<1x1x64xf32>
    %218 = vector.shape_cast %217 : vector<1x1x64xf32> to vector<1x64xf32>
    %c7 = arith.constant 7 : index
    %c0_170 = arith.constant 0 : index
    %219 = memref.load %arg3[%c7, %c0_170] : memref<8x4xf32, #tpu.memory_space<smem>>
    %220 = vector.broadcast %219 : f32 to vector<1x64xf32>
    %221 = arith.mulf %218, %220 : vector<1x64xf32>
    %c7_171 = arith.constant 7 : index
    %222 = memref.load %arg4[%c7_171] : memref<8xf32, #tpu.memory_space<smem>>
    %223 = vector.broadcast %222 : f32 to vector<1x64xf32>
    %224 = arith.addf %221, %223 : vector<1x64xf32>
    %c0_172 = arith.constant 0 : index
    %c1_173 = arith.constant 1 : index
    %c0_174 = arith.constant 0 : index
    %225 = vector.load %arg2[%c0_172, %c1_173, %c0_174] : memref<1x4x64xf32, #tpu.memory_space<vmem>>, vector<1x1x64xf32>
    %226 = vector.shape_cast %225 : vector<1x1x64xf32> to vector<1x64xf32>
    %c7_175 = arith.constant 7 : index
    %c1_176 = arith.constant 1 : index
    %227 = memref.load %arg3[%c7_175, %c1_176] : memref<8x4xf32, #tpu.memory_space<smem>>
    %228 = vector.broadcast %227 : f32 to vector<1x64xf32>
    %229 = arith.mulf %226, %228 : vector<1x64xf32>
    %230 = arith.addf %224, %229 : vector<1x64xf32>
    %c0_177 = arith.constant 0 : index
    %c2_178 = arith.constant 2 : index
    %c0_179 = arith.constant 0 : index
    %231 = vector.load %arg2[%c0_177, %c2_178, %c0_179] : memref<1x4x64xf32, #tpu.memory_space<vmem>>, vector<1x1x64xf32>
    %232 = vector.shape_cast %231 : vector<1x1x64xf32> to vector<1x64xf32>
    %c7_180 = arith.constant 7 : index
    %c2_181 = arith.constant 2 : index
    %233 = memref.load %arg3[%c7_180, %c2_181] : memref<8x4xf32, #tpu.memory_space<smem>>
    %234 = vector.broadcast %233 : f32 to vector<1x64xf32>
    %235 = arith.mulf %232, %234 : vector<1x64xf32>
    %236 = arith.addf %230, %235 : vector<1x64xf32>
    %c0_182 = arith.constant 0 : index
    %c3_183 = arith.constant 3 : index
    %c0_184 = arith.constant 0 : index
    %237 = vector.load %arg2[%c0_182, %c3_183, %c0_184] : memref<1x4x64xf32, #tpu.memory_space<vmem>>, vector<1x1x64xf32>
    %238 = vector.shape_cast %237 : vector<1x1x64xf32> to vector<1x64xf32>
    %c7_185 = arith.constant 7 : index
    %c3_186 = arith.constant 3 : index
    %239 = memref.load %arg3[%c7_185, %c3_186] : memref<8x4xf32, #tpu.memory_space<smem>>
    %240 = vector.broadcast %239 : f32 to vector<1x64xf32>
    %241 = arith.mulf %238, %240 : vector<1x64xf32>
    %242 = arith.addf %236, %241 : vector<1x64xf32>
    %cst_187 = arith.constant 0.000000e+00 : f32
    %243 = vector.broadcast %cst_187 : f32 to vector<1x64xf32>
    %244 = arith.maximumf %242, %243 : vector<1x64xf32>
    %c0_188 = arith.constant 0 : index
    %c7_189 = arith.constant 7 : index
    %c0_190 = arith.constant 0 : index
    %245 = vector.load %arg5[%c0_188, %c7_189, %c0_190] : memref<1x8x64xf32, #tpu.memory_space<vmem>>, vector<1x1x64xf32>
    %246 = vector.shape_cast %245 : vector<1x1x64xf32> to vector<1x64xf32>
    %247 = vector.shape_cast %244 : vector<1x64xf32> to vector<1x1x64xf32>
    tpu.vector_store %arg5[%c0_188, %c7_189, %c0_190], %247 {strides = array<i32>} : memref<1x8x64xf32, #tpu.memory_space<vmem>>, vector<1x1x64xf32>,
    return
  }
  func.func @transform_0(%arg0: i32, %arg1: i32) -> (i32, i32, i32) {
    %c0_i32 = arith.constant 0 : i32
    %c0_i32_0 = arith.constant 0 : i32
    return %arg0, %c0_i32, %arg1 : i32, i32, i32
  }
  func.func @transform_1(%arg0: i32, %arg1: i32) -> (i32, i32) {
    %c0_i32 = arith.constant 0 : i32
    %c0_i32_0 = arith.constant 0 : i32
    %c0_i32_1 = arith.constant 0 : i32
    return %c0_i32, %c0_i32_0 : i32, i32
  }
  func.func @transform_2(%arg0: i32, %arg1: i32) -> i32 {
    %c0_i32 = arith.constant 0 : i32
    %c0_i32_0 = arith.constant 0 : i32
    return %c0_i32 : i32
  }
  func.func @transform_3(%arg0: i32, %arg1: i32) -> (i32, i32, i32) {
    %c0_i32 = arith.constant 0 : i32
    %c0_i32_0 = arith.constant 0 : i32
    return %arg0, %c0_i32, %arg1 : i32, i32, i32
  }
}

</mosaic_0001>

<llo_original>
// kernel: tpu_custom_call.1
$region0: #{tpu_custom_call.1}
  #allocation0 [shape = 'u32[]', space=smem, size = 0x4, offset = 0x4, fixed_abs, tag = 'smem constant byte address 0x4 - core index']
  #allocation1 [shape = 'u32[144,128]{1,0:T(1,128)}', space=vmem, size = 0x12000, scoped, tag = 'internal scratch']
  %s0 = inlined_call_operand.vmem [shape: f32[2,4,64], index: 0, kind: input, shape index: {}]
  %s1 = inlined_call_operand.vmem [shape: f32[8,4], index: 1, kind: input, shape index: {}]
  %s2 = inlined_call_operand.vmem [shape: f32[8], index: 2, kind: input, shape index: {}]
  %s3 = inlined_call_operand.hbm [shape: f32[2,8,64], index: 3, kind: output, shape index: {}]
  %s4 = sld [smem:[#allocation0]]
  $region53: #{tpu_custom_call.1} parent=0
    _
  %s6 = ssub.s32 1, %s4
  %s7 = scalar_select 0, %s6, %s4
  $region1: #{tpu_custom_call.1} parent=0
    #allocation2 [shape = 'u8[4096]{0}', space=smem, size = 0x1000, scoped, tag = 'input window, operand 1, single buffered']
    #allocation3 [shape = 's32[2]{0}', space=sflag, size = 0x8, scoped, tag = 'scoped memory for tpu_custom_call.1']
    #allocation4 [shape = 's32[2]{0}', space=sflag, size = 0x8, scoped, tag = 'scoped memory for tpu_custom_call.1']
    #allocation5 [shape = 'u8[512]{0}', space=smem, size = 0x200, scoped, tag = 'input window, operand 2, single buffered']
    #allocation6 [shape = 's32[1]{0}', space=sflag, size = 0x4, scoped, tag = 'scoped memory for tpu_custom_call.1']
    #allocation7 [shape = 'u8[8192]{0}', space=vmem, size = 0x2000, scoped, tag = 'output window, operand 0']
    %8 = vsyncpa [#allocation4], 0
    %9 = vsyncpa [#allocation6], 0
    %10 = vsyncpa [#allocation3], 0
    %s11 = scalar_lea.sflag [#allocation3], 1
    %12 = vsyncpa %s11, 0
    loop: start=0, step=1, limit=4
    $region2: #{tpu_custom_call.1} parent=1 // loop_pre_header
      _
    $region3: #{tpu_custom_call.1} parent=1 // loop_header
      %s14 = sphi 0, %s18
      %p15 = scmp.ge.s32.totalorder %s14, 4
      %s21 = sphi 0, %s33
      %s22 = sphi 0, %s29
      %s23 = sphi 0, %s21
      %s24 = sphi 0, %s22
      %s25 = sphi 0, %s23
      %s26 = sphi 0, %s24
      %s38 = sphi 0, %s40
      %s41 = sphi 0, %s38
      %s42 = sphi 0, %s41
      %s58 = sphi 0, %s42
      %s62 = sphi 0, %s62
      %s64 = sphi 0, %s62
      %s65 = sphi 0, %s64
      %s79 = sphi 0, %s65
      %s83 = sphi 0, %s83
      %s85 = sphi 0, %s83
      %s86 = sphi 0, %s85
      %s100 = sphi 0, %s86
      %s108 = sphi 0, %s110
      %s111 = sphi 0, %s108
      %s112 = sphi 0, %s111
      %s128 = sphi 0, %s112
    $region4: #{tpu_custom_call.1} parent=1 // loop_header_branch
      %17 = sbr.rel (%p15) target = $region8
    $region5: #{tpu_custom_call.1} parent=1 // loop_body
      %s19 = ssub.s32 %s14, 1
      %s20 = ssub.s32 %s14, 2
      %s27 = sadd.s32 1, %s22
      %p28 = scmp.ge.s32.totalorder %s27, 1
      %s29 = scalar_select %p28, 0, %s27
      %s30 = sadd.s32 1, %s21
      %s31 = scalar_select %p28, %s30, %s21
      %p32 = scmp.ge.s32.totalorder %s31, 2
      %s33 = scalar_select %p32, 0, %s31
      %s34 = ssub.s32 %s21, %s33
      %s35 = ssub.s32 %s22, %s29
      %s36 = sor.u32 %s34, %s35
      %p37 = scmp.eq.s32.totalorder %s36, 0
      %s39 = sadd.s32 %s38, 1
      %s40 = scalar_select %p37, %s38, %s39
      %p43 = pneg %p37
      %p44 = scmp.eq.s32.totalorder %s14, 1
      %p45 = por %p43, %p44
      %p46 = scmp.ne.s32.totalorder %s38, %s41
      %p47 = scmp.eq.s32.totalorder %s14, 0
      %p48 = por %p46, %p47
      %p49 = scmp.ne.s32.totalorder %s38, %s41
      %p50 = scmp.eq.s32.totalorder %s19, 1
      %p51 = por %p49, %p50
      %p52 = scmp.ne.s32.totalorder %s41, %s42
      %p53 = scmp.eq.s32.totalorder %s19, 0
      %p54 = por %p52, %p53
      %p55 = scmp.ne.s32.totalorder %s41, %s42
      %p56 = scmp.eq.s32.totalorder %s20, 1
      %p57 = por %p55, %p56
      %p59 = scmp.ne.s32.totalorder %s42, %s58
      %p60 = scmp.eq.s32.totalorder %s20, 0
      %p61 = por %p59, %p60
      %s63 = sadd.s32 %s62, 1
      %p66 = scmp.eq.s32.totalorder %s14, 1
      %p67 = scmp.ne.s32.totalorder %s62, %s64
      %p68 = scmp.eq.s32.totalorder %s14, 0
      %p69 = por %p67, %p68
      %p70 = scmp.ne.s32.totalorder %s62, %s64
      %p71 = scmp.eq.s32.totalorder %s19, 1
      %p72 = por %p70, %p71
      %p73 = scmp.ne.s32.totalorder %s64, %s65
      %p74 = scmp.eq.s32.totalorder %s19, 0
      %p75 = por %p73, %p74
      %p76 = scmp.ne.s32.totalorder %s64, %s65
      %p77 = scmp.eq.s32.totalorder %s20, 1
      %p78 = por %p76, %p77
      %p80 = scmp.ne.s32.totalorder %s65, %s79
      %p81 = scmp.eq.s32.totalorder %s20, 0
      %p82 = por %p80, %p81
      %s84 = sadd.s32 %s83, 1
      %p87 = scmp.eq.s32.totalorder %s14, 1
      %p88 = scmp.ne.s32.totalorder %s83, %s85
      %p89 = scmp.eq.s32.totalorder %s14, 0
      %p90 = por %p88, %p89
      %p91 = scmp.ne.s32.totalorder %s83, %s85
      %p92 = scmp.eq.s32.totalorder %s19, 1
      %p93 = por %p91, %p92
      %p94 = scmp.ne.s32.totalorder %s85, %s86
      %p95 = scmp.eq.s32.totalorder %s19, 0
      %p96 = por %p94, %p95
      %p97 = scmp.ne.s32.totalorder %s85, %s86
      %p98 = scmp.eq.s32.totalorder %s20, 1
      %p99 = por %p97, %p98
      %p101 = scmp.ne.s32.totalorder %s86, %s100
      %p102 = scmp.eq.s32.totalorder %s20, 0
      %p103 = por %p101, %p102
      %s104 = ssub.s32 %s21, %s33
      %s105 = ssub.s32 %s22, %s29
      %s106 = sor.u32 %s104, %s105
      %p107 = scmp.eq.s32.totalorder %s106, 0
      %s109 = sadd.s32 %s108, 1
      %s110 = scalar_select %p107, %s108, %s109
      %p113 = pneg %p107
      %p114 = scmp.eq.s32.totalorder %s14, 1
      %p115 = por %p113, %p114
      %p116 = scmp.ne.s32.totalorder %s108, %s111
      %p117 = scmp.eq.s32.totalorder %s14, 0
      %p118 = por %p116, %p117
      %p119 = scmp.ne.s32.totalorder %s108, %s111
      %p120 = scmp.eq.s32.totalorder %s19, 1
      %p121 = por %p119, %p120
      %p122 = scmp.ne.s32.totalorder %s111, %s112
      %p123 = scmp.eq.s32.totalorder %s19, 0
      %p124 = por %p122, %p123
      %p125 = scmp.ne.s32.totalorder %s111, %s112
      %p126 = scmp.eq.s32.totalorder %s20, 1
      %p127 = por %p125, %p126
      %p129 = scmp.ne.s32.totalorder %s112, %s128
      %p130 = scmp.eq.s32.totalorder %s20, 0
      %p131 = por %p129, %p130
      %p132 = scmp.le.s32.totalorder 1, %s14
      %p133 = scmp.lt.s32.totalorder %s14, 3
      %p134 = pnand %p132, %p133
      %p135 = pneg %p134
      // Predicated region
      $region9: #{tpu_custom_call.1} parent=5 // pred_check
        _
      $region10: #{tpu_custom_call.1} parent=5 // pred_check_branch
        %137 = sbr.rel (%p134) target = $region12
      $region11: #{tpu_custom_call.1} parent=5 // pred_region
        %s138 = ssub.s32 %s14, 1
        // Predicated region
        $region13: #{tpu_custom_call.1} parent=11 // pred_check
          %p139 = pneg %p75
        $region14: #{tpu_custom_call.1} parent=11 // pred_check_branch
          %141 = sbr.rel (%p139) target = $region16
        $region15: #{tpu_custom_call.1} parent=11 // pred_region
          %s143 = ssub.s32 128, 128
          %144 = vsyncadd [#allocation4], %s143
          %s146 = sshll.u32 %s1, 4
          %s147 = int_to_ptr.vmem [resolvable:$true] %s146
          %149 = dma.vmem_to_smem %s147, 128, [#allocation2], [#allocation4]
        $region16: #{tpu_custom_call.1} parent=11 // pred_fallthru
          _
        // Predicated region
        $region17: #{tpu_custom_call.1} parent=11 // pred_check
          %p150 = pneg %p96
        $region18: #{tpu_custom_call.1} parent=11 // pred_check_branch
          %152 = sbr.rel (%p150) target = $region20
        $region19: #{tpu_custom_call.1} parent=11 // pred_region
          %s154 = ssub.s32 16, 16
          %155 = vsyncadd [#allocation6], %s154
          %s157 = sshll.u32 %s2, 4
          %s158 = int_to_ptr.vmem [resolvable:$true] %s157
          %160 = dma.vmem_to_smem %s158, 16, [#allocation5], [#allocation6]
        $region20: #{tpu_custom_call.1} parent=11 // pred_fallthru
          _
      $region12: #{tpu_custom_call.1} parent=5 // pred_fallthru
        _
      %p161 = scmp.lt.s32.totalorder %s14, 2
      // Predicated region
      $region21: #{tpu_custom_call.1} parent=5 // pred_check
        %p162 = pneg %p161
      $region22: #{tpu_custom_call.1} parent=5 // pred_check_branch
        %164 = sbr.rel (%p162) target = $region24
      $region23: #{tpu_custom_call.1} parent=5 // pred_region
        // Predicated region
        $region25: #{tpu_custom_call.1} parent=23 // pred_check
          %p165 = pneg %p48
        $region26: #{tpu_custom_call.1} parent=23 // pred_check_branch
          %167 = sbr.rel (%p165) target = $region28
        $region27: #{tpu_custom_call.1} parent=23 // pred_region
          %p168 = scmp.lt.s32.totalorder %s21, 1
          %s169 = scalar_select %p168, %s21, 1
          %p170 = scmp.lt.s32.totalorder %s22, 0
          %s171 = scalar_select %p170, %s22, 0
          %s172 = sadd.s32 %s171, %s169
          %s173 = smul.addr %s172, 4
          %s174 = scalar_lea.vmem %s0, %s173
        $region28: #{tpu_custom_call.1} parent=23 // pred_fallthru
          _
      $region24: #{tpu_custom_call.1} parent=5 // pred_fallthru
        _
      %p175 = scmp.le.s32.totalorder 1, %s14
      %p176 = scmp.lt.s32.totalorder %s14, 3
      %p177 = pnand %p175, %p176
      %p178 = pneg %p177
      // Predicated region
      $region29: #{tpu_custom_call.1} parent=5 // pred_check
        _
      $region30: #{tpu_custom_call.1} parent=5 // pred_check_branch
        %180 = sbr.rel (%p177) target = $region32
      $region31: #{tpu_custom_call.1} parent=5 // pred_region
        %s181 = ssub.s32 %s14, 1
        // Predicated region
        $region33: #{tpu_custom_call.1} parent=31 // pred_check
          %p182 = pneg %p75
        $region34: #{tpu_custom_call.1} parent=31 // pred_check_branch
          %184 = sbr.rel (%p182) target = $region36
        $region35: #{tpu_custom_call.1} parent=31 // pred_region
          %185 = dma.done [#allocation4], 128
        $region36: #{tpu_custom_call.1} parent=31 // pred_fallthru
          _
        // Predicated region
        $region37: #{tpu_custom_call.1} parent=31 // pred_check
          %p186 = pneg %p96
        $region38: #{tpu_custom_call.1} parent=31 // pred_check_branch
          %188 = sbr.rel (%p186) target = $region40
        $region39: #{tpu_custom_call.1} parent=31 // pred_region
          %189 = dma.done [#allocation6], 16
        $region40: #{tpu_custom_call.1} parent=31 // pred_fallthru
          _
        %190 = sfence
        %p191 = scmp.lt.s32.totalorder %s23, 1
        %s192 = scalar_select %p191, %s23, 1
        %p193 = scmp.lt.s32.totalorder %s24, 0
        %s194 = scalar_select %p193, %s24, 0
        %s195 = sadd.s32 %s194, %s192
        %s196 = smul.addr %s195, 4
        %s197 = scalar_lea.vmem %s0, %s196
        %p198 = pneg %p54
        %p199 = pneg %p51
        %p200 = pneg %p75
        %p201 = pneg %p72
        %p202 = pneg %p96
        %p203 = pneg %p93
        %p204 = pneg %p124
        %p205 = pneg %p121
        %s206 = sand.u32 %s111, 1
        %s207 = scalar_lea.sflag [#allocation3], %s206
        %s208 = sand.u32 %s111, 1
        %s209 = smul.addr %s208, 8
        %s210 = scalar_lea.vmem [#allocation7], %s209
        %p211 = scmp.lt.s32.totalorder %s23, 1
        %s212 = scalar_select %p211, %s23, 1
        %p213 = scmp.lt.s32.totalorder %s24, 0
        %s214 = scalar_select %p213, %s24, 0
        %s215 = sadd.s32 %s214, %s212
        %s216 = smul.addr %s215, 4
        %s217 = scalar_lea.vmem %s0, %s216
        %v218 = vld [vmem:[%s217] sm:$0x1]
        %s219 = sld [smem:[#allocation2]]
        %v220 = vstv %s219
        %v221 = vmul.f32 %v218, %v220
        %s222 = sld [smem:[#allocation5]]
        %v223 = vstv %s222
        %v224 = vadd.f32 %v221, %v223
        %v225 = vld [vmem:[%s217 + $0x1] sm:$0x1]
        %s226 = sld [smem:[#allocation2 + $0x1]]
        %v227 = vstv %s226
        %v228 = vmul.f32 %v225, %v227
        %v229 = vadd.f32 %v224, %v228
        %v230 = vld [vmem:[%s217 + $0x2] sm:$0x1]
        %s231 = sld [smem:[#allocation2 + $0x2]]
        %v232 = vstv %s231
        %v233 = vmul.f32 %v230, %v232
        %v234 = vadd.f32 %v229, %v233
        %v235 = vld [vmem:[%s217 + $0x3] sm:$0x1]
        %s236 = sld [smem:[#allocation2 + $0x3]]
        %v237 = vstv %s236
        %v238 = vmul.f32 %v235, %v237
        %v239 = vadd.f32 %v234, %v238
        %v240 = vmax.f32 %v239, 0.0
        %vm241 = vcmask 516096
        %242 = vst.msk [vmem:[%s210] sm:$0x1] %vm241, %v240
        %v243 = vld [vmem:[%s217] sm:$0x1]
        %s244 = sld [smem:[#allocation2 + $0x80]]
        %v245 = vstv %s244
        %v246 = vmul.f32 %v243, %v245
        %s247 = sld [smem:[#allocation5 + $0x1]]
        %v248 = vstv %s247
        %v249 = vadd.f32 %v246, %v248
        %v250 = vld [vmem:[%s217 + $0x1] sm:$0x1]
        %s251 = sld [smem:[#allocation2 + $0x81]]
        %v252 = vstv %s251
        %v253 = vmul.f32 %v250, %v252
        %v254 = vadd.f32 %v249, %v253
        %v255 = vld [vmem:[%s217 + $0x2] sm:$0x1]
        %s256 = sld [smem:[#allocation2 + $0x82]]
        %v257 = vstv %s256
        %v258 = vmul.f32 %v255, %v257
        %v259 = vadd.f32 %v254, %v258
        %v260 = vld [vmem:[%s217 + $0x3] sm:$0x1]
        %s261 = sld [smem:[#allocation2 + $0x83]]
        %v262 = vstv %s261
        %v263 = vmul.f32 %v260, %v262
        %v264 = vadd.f32 %v259, %v263
        %v265 = vmax.f32 %v264, 0.0
        %266 = vst.msk [vmem:[%s210 + $0x1] sm:$0x1] %vm241, %v265
        %v267 = vld [vmem:[%s217] sm:$0x1]
        %s268 = sld [smem:[#allocation2 + $0x100]]
        %v269 = vstv %s268
        %v270 = vmul.f32 %v267, %v269
        %s271 = sld [smem:[#allocation5 + $0x2]]
        %v272 = vstv %s271
        %v273 = vadd.f32 %v270, %v272
        %v274 = vld [vmem:[%s217 + $0x1] sm:$0x1]
        %s275 = sld [smem:[#allocation2 + $0x101]]
        %v276 = vstv %s275
        %v277 = vmul.f32 %v274, %v276
        %v278 = vadd.f32 %v273, %v277
        %v279 = vld [vmem:[%s217 + $0x2] sm:$0x1]
        %s280 = sld [smem:[#allocation2 + $0x102]]
        %v281 = vstv %s280
        %v282 = vmul.f32 %v279, %v281
        %v283 = vadd.f32 %v278, %v282
        %v284 = vld [vmem:[%s217 + $0x3] sm:$0x1]
        %s285 = sld [smem:[#allocation2 + $0x103]]
        %v286 = vstv %s285
        %v287 = vmul.f32 %v284, %v286
        %v288 = vadd.f32 %v283, %v287
        %v289 = vmax.f32 %v288, 0.0
        %290 = vst.msk [vmem:[%s210 + $0x2] sm:$0x1] %vm241, %v289
        %v291 = vld [vmem:[%s217] sm:$0x1]
        %s292 = sld [smem:[#allocation2 + $0x180]]
        %v293 = vstv %s292
        %v294 = vmul.f32 %v291, %v293
        %s295 = sld [smem:[#allocation5 + $0x3]]
        %v296 = vstv %s295
        %v297 = vadd.f32 %v294, %v296
        %v298 = vld [vmem:[%s217 + $0x1] sm:$0x1]
        %s299 = sld [smem:[#allocation2 + $0x181]]
        %v300 = vstv %s299
        %v301 = vmul.f32 %v298, %v300
        %v302 = vadd.f32 %v297, %v301
        %v303 = vld [vmem:[%s217 + $0x2] sm:$0x1]
        %s304 = sld [smem:[#allocation2 + $0x182]]
        %v305 = vstv %s304
        %v306 = vmul.f32 %v303, %v305
        %v307 = vadd.f32 %v302, %v306
        %v308 = vld [vmem:[%s217 + $0x3] sm:$0x1]
        %s309 = sld [smem:[#allocation2 + $0x183]]
        %v310 = vstv %s309
        %v311 = vmul.f32 %v308, %v310
        %v312 = vadd.f32 %v307, %v311
        %v313 = vmax.f32 %v312, 0.0
        %314 = vst.msk [vmem:[%s210 + $0x3] sm:$0x1] %vm241, %v313
        %v315 = vld [vmem:[%s217] sm:$0x1]
        %s316 = sld [smem:[#allocation2 + $0x200]]
        %v317 = vstv %s316
        %v318 = vmul.f32 %v315, %v317
        %s319 = sld [smem:[#allocation5 + $0x4]]
        %v320 = vstv %s319
        %v321 = vadd.f32 %v318, %v320
        %v322 = vld [vmem:[%s217 + $0x1] sm:$0x1]
        %s323 = sld [smem:[#allocation2 + $0x201]]
        %v324 = vstv %s323
        %v325 = vmul.f32 %v322, %v324
        %v326 = vadd.f32 %v321, %v325
        %v327 = vld [vmem:[%s217 + $0x2] sm:$0x1]
        %s328 = sld [smem:[#allocation2 + $0x202]]
        %v329 = vstv %s328
        %v330 = vmul.f32 %v327, %v329
        %v331 = vadd.f32 %v326, %v330
        %v332 = vld [vmem:[%s217 + $0x3] sm:$0x1]
        %s333 = sld [smem:[#allocation2 + $0x203]]
        %v334 = vstv %s333
        %v335 = vmul.f32 %v332, %v334
        %v336 = vadd.f32 %v331, %v335
        %v337 = vmax.f32 %v336, 0.0
        %338 = vst.msk [vmem:[%s210 + $0x4] sm:$0x1] %vm241, %v337
        %v339 = vld [vmem:[%s217] sm:$0x1]
        %s340 = sld [smem:[#allocation2 + $0x280]]
        %v341 = vstv %s340
        %v342 = vmul.f32 %v339, %v341
        %s343 = sld [smem:[#allocation5 + $0x5]]
        %v344 = vstv %s343
        %v345 = vadd.f32 %v342, %v344
        %v346 = vld [vmem:[%s217 + $0x1] sm:$0x1]
        %s347 = sld [smem:[#allocation2 + $0x281]]
        %v348 = vstv %s347
        %v349 = vmul.f32 %v346, %v348
        %v350 = vadd.f32 %v345, %v349
        %v351 = vld [vmem:[%s217 + $0x2] sm:$0x1]
        %s352 = sld [smem:[#allocation2 + $0x282]]
        %v353 = vstv %s352
        %v354 = vmul.f32 %v351, %v353
        %v355 = vadd.f32 %v350, %v354
        %v356 = vld [vmem:[%s217 + $0x3] sm:$0x1]
        %s357 = sld [smem:[#allocation2 + $0x283]]
        %v358 = vstv %s357
        %v359 = vmul.f32 %v356, %v358
        %v360 = vadd.f32 %v355, %v359
        %v361 = vmax.f32 %v360, 0.0
        %362 = vst.msk [vmem:[%s210 + $0x5] sm:$0x1] %vm241, %v361
        %v363 = vld [vmem:[%s217] sm:$0x1]
        %s364 = sld [smem:[#allocation2 + $0x300]]
        %v365 = vstv %s364
        %v366 = vmul.f32 %v363, %v365
        %s367 = sld [smem:[#allocation5 + $0x6]]
        %v368 = vstv %s367
        %v369 = vadd.f32 %v366, %v368
        %v370 = vld [vmem:[%s217 + $0x1] sm:$0x1]
        %s371 = sld [smem:[#allocation2 + $0x301]]
        %v372 = vstv %s371
        %v373 = vmul.f32 %v370, %v372
        %v374 = vadd.f32 %v369, %v373
        %v375 = vld [vmem:[%s217 + $0x2] sm:$0x1]
        %s376 = sld [smem:[#allocation2 + $0x302]]
        %v377 = vstv %s376
        %v378 = vmul.f32 %v375, %v377
        %v379 = vadd.f32 %v374, %v378
        %v380 = vld [vmem:[%s217 + $0x3] sm:$0x1]
        %s381 = sld [smem:[#allocation2 + $0x303]]
        %v382 = vstv %s381
        %v383 = vmul.f32 %v380, %v382
        %v384 = vadd.f32 %v379, %v383
        %v385 = vmax.f32 %v384, 0.0
        %386 = vst.msk [vmem:[%s210 + $0x6] sm:$0x1] %vm241, %v385
        %v387 = vld [vmem:[%s217] sm:$0x1]
        %s388 = sld [smem:[#allocation2 + $0x380]]
        %v389 = vstv %s388
        %v390 = vmul.f32 %v387, %v389
        %s391 = sld [smem:[#allocation5 + $0x7]]
        %v392 = vstv %s391
        %v393 = vadd.f32 %v390, %v392
        %v394 = vld [vmem:[%s217 + $0x1] sm:$0x1]
        %s395 = sld [smem:[#allocation2 + $0x381]]
        %v396 = vstv %s395
        %v397 = vmul.f32 %v394, %v396
        %v398 = vadd.f32 %v393, %v397
        %v399 = vld [vmem:[%s217 + $0x2] sm:$0x1]
        %s400 = sld [smem:[#allocation2 + $0x382]]
        %v401 = vstv %s400
        %v402 = vmul.f32 %v399, %v401
        %v403 = vadd.f32 %v398, %v402
        %v404 = vld [vmem:[%s217 + $0x3] sm:$0x1]
        %s405 = sld [smem:[#allocation2 + $0x383]]
        %v406 = vstv %s405
        %v407 = vmul.f32 %v404, %v406
        %v408 = vadd.f32 %v403, %v407
        %v409 = vmax.f32 %v408, 0.0
        %410 = vst.msk [vmem:[%s210 + $0x7] sm:$0x1] %vm241, %v409
        %s411 = sand.u32 %s111, 1
        %s412 = scalar_lea.sflag [#allocation3], %s411
        %s413 = sand.u32 %s111, 1
        %s414 = smul.addr %s413, 8
        %s415 = scalar_lea.vmem [#allocation7], %s414
        // Predicated region
        $region41: #{tpu_custom_call.1} parent=31 // pred_check
          %p416 = pneg %p121
        $region42: #{tpu_custom_call.1} parent=31 // pred_check_branch
          %418 = sbr.rel (%p416) target = $region44
        $region43: #{tpu_custom_call.1} parent=31 // pred_region
          %s420 = ssub.s32 128, 128
          %421 = vsyncadd %s412, %s420
          %s422 = sadd.s32 %s24, %s23
          %s423 = smul.addr %s422, 128
          %s424 = scalar_lea.hbm %s3, %s423
          %s426 = sshll.u32 %s415, 4
          %s427 = int_to_ptr.vmem [resolvable:$true] %s426
          %429 = dma.vmem_to_hbm [thread:$0]  %s427, 128, %s424, %s412
        $region44: #{tpu_custom_call.1} parent=31 // pred_fallthru
          _
      $region32: #{tpu_custom_call.1} parent=5 // pred_fallthru
        _
      %p430 = scmp.le.s32.totalorder 2, %s14
      // Predicated region
      $region45: #{tpu_custom_call.1} parent=5 // pred_check
        %p431 = pneg %p430
      $region46: #{tpu_custom_call.1} parent=5 // pred_check_branch
        %433 = sbr.rel (%p431) target = $region48
      $region47: #{tpu_custom_call.1} parent=5 // pred_region
        %s434 = ssub.s32 %s14, 2
        // Predicated region
        $region49: #{tpu_custom_call.1} parent=47 // pred_check
          %p435 = pneg %p127
        $region50: #{tpu_custom_call.1} parent=47 // pred_check_branch
          %437 = sbr.rel (%p435) target = $region52
        $region51: #{tpu_custom_call.1} parent=47 // pred_region
          %s438 = sand.u32 %s112, 1
          %s439 = scalar_lea.sflag [#allocation3], %s438
          %s440 = sand.u32 %s112, 1
          %s441 = smul.addr %s440, 8
          %s442 = scalar_lea.vmem [#allocation7], %s441
          %443 = dma.done %s439, 128
        $region52: #{tpu_custom_call.1} parent=47 // pred_fallthru
          _
      $region48: #{tpu_custom_call.1} parent=5 // pred_fallthru
        _
    $region6: #{tpu_custom_call.1} parent=1 // loop_footer
      %s18 = sadd.s32 1, %s14
    $region7: #{tpu_custom_call.1} parent=1 // loop_footer_branch
      %13 = sbr.rel target = $region3
    $region8: #{tpu_custom_call.1} parent=1 // loop_exit
      _
    %444 = vsyncpa [#allocation3], 1
    %s445 = scalar_lea.sflag [#allocation3], 1
    %446 = vsyncpa %s445, 1
    %447 = vsyncpa [#allocation4], 1
    %s448 = scalar_lea.sflag [#allocation4], 1
    %449 = vsyncpa %s448, 1
    %450 = vsyncpa [#allocation6], 1

</llo_original>
